<compile_context>
chip_gen: v6e
topology: v6e:2x2x1
jax: 0.10.0
libtpu: 0.0.40
codegen_flags: <defaults>
</compile_context>

<pallas_src>
import jax
import jax.numpy as jnp
from jax.experimental import pallas as pl
from jax.experimental.pallas import tpu as pltpu


LANE = 128


def _round_up(x: int, m: int) -> int:
    return ((x + m - 1) // m) * m


def _vmem_budget_bytes() -> int:
    """Generation-aware VMEM budget: leave headroom below physical capacity."""
    cap = 128 << 20
    try:
        info = pltpu.get_tpu_info()
        cap = int(getattr(info, "vmem_capacity_bytes", cap))
    except Exception:
        pass
    # v7x: 64 MiB physical -> ~56 MiB budget; v5e/v6e: 128 MiB -> 100 MiB budget.
    return max(32 << 20, min(cap - (8 << 20), 100 << 20))


# ---------------------------------------------------------------------------
# Kernels
# ---------------------------------------------------------------------------
def _mlp_g_kernel(h_ref, w1_ref, b1_ref, w2_ref, b2_ref, out_ref):
    """Resident-weight path: grid = (batch tiles,)."""
    z1 = jnp.dot(h_ref[...], w1_ref[...], preferred_element_type=jnp.float32) + b1_ref[...]
    a1 = jnp.maximum(z1, 0.2 * z1)  # LeakyReLU(0.2), f32 on the VPU
    z2 = jnp.dot(a1.astype(w2_ref.dtype), w2_ref[...],
                 preferred_element_type=jnp.float32) + b2_ref[...]
    out_ref[...] = jnp.maximum(z2, 0.0).astype(out_ref.dtype)


def _mlp_g_kernel_ntiled(h_ref, w1_ref, b1_ref, w2_ref, b2_ref, out_ref, a1_ref):
    """N-tiled path: grid = (batch tiles, res tiles). a1 computed once per batch
    tile (at j == 0) into a VMEM scratch, reused across all N tiles."""
    @pl.when(pl.program_id(1) == 0)
    def _():
        z1 = jnp.dot(h_ref[...], w1_ref[...], preferred_element_type=jnp.float32) + b1_ref[...]
        a1_ref[...] = jnp.maximum(z1, 0.2 * z1).astype(a1_ref.dtype)

    z2 = jnp.dot(a1_ref[...], w2_ref[...], preferred_element_type=jnp.float32) + b2_ref[...]
    out_ref[...] = jnp.maximum(z2, 0.0).astype(out_ref.dtype)


# ---------------------------------------------------------------------------
# Parameter prep (call ONCE, outside the per-step path)
# ---------------------------------------------------------------------------
def prepare_mlp_g_params(w1, b1, w2, b2, *, compute_dtype=jnp.bfloat16):
    """w1: (nz+attSize, ngh), w2: (ngh, resSize). Returns padded bf16 weights and
    f32 biases, lane-aligned to multiples of 128 (padding is exact zeros)."""
    in_dim, ngh = w1.shape
    ngh2, res = w2.shape
    assert ngh2 == ngh
    in_p = _round_up(in_dim, LANE)
    ngh_p = _round_up(ngh, LANE)
    res_p = _round_up(res, LANE)

    f32 = jnp.float32
    w1p = jnp.zeros((in_p, ngh_p), compute_dtype).at[:in_dim, :ngh].set(w1.astype(compute_dtype))
    w2p = jnp.zeros((ngh_p, res_p), compute_dtype).at[:ngh, :res].set(w2.astype(compute_dtype))
    b1p = jnp.zeros((1, ngh_p), f32).at[:, :ngh].set(jnp.asarray(b1, f32).reshape(1, -1))
    b2p = jnp.zeros((1, res_p), f32).at[:, :res].set(jnp.asarray(b2, f32).reshape(1, -1))
    return w1p, b1p, w2p, b2p


# ---------------------------------------------------------------------------
# Forward
# ---------------------------------------------------------------------------
def mlp_g_forward(noise, att, w1p, b1p, w2p, b2p, *, out_features, tile_b=256):
    """noise: (B, nz), att: (B, attSize); padded params from prepare_mlp_g_params.
    Returns (B, out_features) float32."""
    B, nz = noise.shape
    Ba, att_size = att.shape
    assert B == Ba
    in_dim = nz + att_size

    in_p, ngh_p = w1p.shape
    res_p = w2p.shape[1]
    assert in_p >= in_dim and res_p >= out_features
    cd = w1p.dtype
    itemsize = jnp.dtype(cd).itemsize
    f32 = jnp.float32

    # Batch tile: as large as reasonable (amortizes resident weights / per-step
    # overhead); no forced multi-step split for small batches.
    tb = min(int(tile_b), _round_up(B, 8))
    tb = _round_up(tb, 8)
    B_p = _round_up(B, tb)
    nb = B_p // tb

    # Fused concat + padding, already in compute dtype (bf16): one small array,
    # half the DMA bytes of an f32 copy. Padding columns/rows are exact zeros.
    h = jnp.zeros((B_p, in_p), cd)
    h = h.at[:B, :nz].set(noise.astype(cd))
    h = h.at[:B, nz:in_dim].set(att.astype(cd))

    budget = _vmem_budget_bytes()
    headroom = 2 << 20

    def simple_fits() -> bool:
        w = 2 * ((in_p * ngh_p + ngh_p * res_p) * itemsize + (ngh_p + res_p) * 4)
        act = 2 * tb * in_p * itemsize + 2 * tb * res_p * 4
        interm = tb * ngh_p * 4 + tb * ngh_p * itemsize + tb * res_p * 4
        return w + act + interm + headroom <= budget

    def ntiled_fits(tn: int) -> bool:
        w = 2 * ((in_p * ngh_p + ngh_p * tn) * itemsize + (ngh_p + tn) * 4)
        act = 2 * tb * in_p * itemsize + 2 * tb * tn * 4
        scratch = tb * ngh_p * itemsize
        interm = tb * ngh_p * 4 + tb * tn * 4
        return w + act + scratch + interm + headroom <= budget

    batch_sem = "parallel" if (nb > 1 and B_p >= 512) else "arbitrary"

    weight_bytes = (in_p * ngh_p + ngh_p * res_p) * itemsize + (ngh_p + res_p) * 4
    cost = pl.CostEstimate(
        flops=2 * B_p * (in_p * ngh_p + ngh_p * res_p),
        transcendentals=0,
        bytes_accessed=int(B_p * in_p * itemsize + weight_bytes + B_p * res_p * 4),
    )

    tn_candidates = [t for t in (2048, 1024, 512, 256, 128) if t < res_p and res_p % t == 0]

    if simple_fits() or not tn_candidates:
        # --- resident-weight path: grid over batch tiles only ---
        out_p = pl.pallas_call(
            _mlp_g_kernel,
            out_shape=jax.ShapeDtypeStruct((B_p, res_p), f32),
            grid_spec=pltpu.PrefetchScalarGridSpec(
                num_scalar_prefetch=0,
                grid=(nb,),
                in_specs=[
                    pl.BlockSpec((tb, in_p), lambda i: (i, 0)),      # h tile (bf16)
                    pl.BlockSpec((in_p, ngh_p), lambda i: (0, 0)),   # W1 (resident)
                    pl.BlockSpec((1, ngh_p), lambda i: (0, 0)),      # b1
                    pl.BlockSpec((ngh_p, res_p), lambda i: (0, 0)),  # W2 (resident)
                    pl.BlockSpec((1, res_p), lambda i: (0, 0)),      # b2
                ],
                out_specs=pl.BlockSpec((tb, res_p), lambda i: (i, 0)),
            ),
            compiler_params=pltpu.CompilerParams(
                dimension_semantics=(batch_sem,),
                vmem_limit_bytes=int(budget),
            ),
            cost_estimate=cost,
        )(h, w1p, b1p, w2p, b2p)
    else:
        # --- N-tiled path (large ngh/res, e.g. v7x 64 MiB VMEM) ---
        tn = next((t for t in tn_candidates if ntiled_fits(t)), tn_candidates[-1])
        # TODO(synk): if W1 alone exceeds the VMEM budget, an additional K/ngh
        # tiling of fc1/fc2 would be required; not implemented here.
        nn = res_p // tn
        out_p = pl.pallas_call(
            _mlp_g_kernel_ntiled,
            out_shape=jax.ShapeDtypeStruct((B_p, res_p), f32),
            grid_spec=pltpu.PrefetchScalarGridSpec(
                num_scalar_prefetch=0,
                grid=(nb, nn),
                in_specs=[
                    pl.BlockSpec((tb, in_p), lambda i, j: (i, 0)),      # h tile
                    pl.BlockSpec((in_p, ngh_p), lambda i, j: (0, 0)),   # W1 (resident)
                    pl.BlockSpec((1, ngh_p), lambda i, j: (0, 0)),      # b1
                    pl.BlockSpec((ngh_p, tn), lambda i, j: (0, j)),     # W2 N-tile
                    pl.BlockSpec((1, tn), lambda i, j: (0, j)),         # b2 N-tile
                ],
                out_specs=pl.BlockSpec((tb, tn), lambda i, j: (i, j)),
                scratch_shapes=[pltpu.VMEM((tb, ngh_p), cd)],           # a1 scratch
            ),
            compiler_params=pltpu.CompilerParams(
                dimension_semantics=(batch_sem, "arbitrary"),
                vmem_limit_bytes=int(budget),
            ),
            cost_estimate=cost,
        )(h, w1p, b1p, w2p, b2p)

    return out_p[:B, :out_features]


if __name__ == "__main__":
    # Small synthetic config (mirrors opt.attSize / opt.nz / opt.ngh / opt.resSize).
    B = 8
    attSize = 16
    nz = 16
    ngh = 64
    resSize = 128

    key = jax.random.PRNGKey(0)
    k_noise, k_att, k_w1, k_w2 = jax.random.split(key, 4)

    noise = jax.random.normal(k_noise, (B, nz), dtype=jnp.float32)
    att = jax.random.normal(k_att, (B, attSize), dtype=jnp.float32)

    # weights_init: Linear weight ~ N(0, 0.02), bias = 0. Stored as (in, out).
    w1 = 0.02 * jax.random.normal(k_w1, (nz + attSize, ngh), dtype=jnp.float32)
    b1 = jnp.zeros((ngh,), dtype=jnp.float32)
    w2 = 0.02 * jax.random.normal(k_w2, (ngh, resSize), dtype=jnp.float32)
    b2 = jnp.zeros((resSize,), dtype=jnp.float32)

    # Parameter prep happens ONCE (outside the per-call path).
    params = prepare_mlp_g_params(w1, b1, w2, b2)

    fwd = jax.jit(mlp_g_forward, static_argnames=("out_features", "tile_b"))
    out = fwd(noise, att, *params, out_features=resSize)
    out = jax.block_until_ready(out)
    assert out.shape == (B, resSize)

    # Pure-JAX reference mirroring the kernel math (bf16 MXU operands, f32 accumulate).
    cd = jnp.bfloat16
    h_ref = jnp.concatenate([noise, att], axis=1)
    z1 = jnp.dot(h_ref.astype(cd), w1.astype(cd), preferred_element_type=jnp.float32) + b1
    a1 = jnp.where(z1 > 0, z1, 0.2 * z1)
    z2 = jnp.dot(a1.astype(cd), w2.astype(cd), preferred_element_type=jnp.float32) + b2
    ref = jnp.maximum(z2, 0.0)
    assert jnp.allclose(out, ref, atol=2e-3, rtol=2e-3), float(jnp.max(jnp.abs(out - ref)))

    print("KERNEL_OK")
</pallas_src>

<mosaic_0001>
module attributes {stable_mosaic.version = 11 : i64} {
  func.func @_mlp_g_kernel(%arg0: i32, %arg1: memref<8x128xbf16, #tpu.memory_space<vmem>>, %arg2: memref<128x128xbf16, #tpu.memory_space<vmem>>, %arg3: memref<1x128xf32, #tpu.memory_space<vmem>>, %arg4: memref<128x128xbf16, #tpu.memory_space<vmem>>, %arg5: memref<1x128xf32, #tpu.memory_space<vmem>>, %arg6: memref<8x128xf32, #tpu.memory_space<vmem>>) attributes {dimension_semantics = [#tpu.dimension_semantics<arbitrary>], iteration_bounds = array<i64: 1>, scalar_prefetch = 0 : i64, scratch_operands = 0 : i64, tpu.core_type = #tpu.core_type<tc>, window_params = [{transform_indices = @transform_0, window_bounds = array<i64: 8, 128>}, {pipeline_mode = #tpu.pipeline_mode<synchronous>, transform_indices = @transform_1, window_bounds = array<i64: 128, 128>}, {pipeline_mode = #tpu.pipeline_mode<synchronous>, transform_indices = @transform_2, window_bounds = array<i64: 1, 128>}, {pipeline_mode = #tpu.pipeline_mode<synchronous>, transform_indices = @transform_3, window_bounds = array<i64: 128, 128>}, {pipeline_mode = #tpu.pipeline_mode<synchronous>, transform_indices = @transform_4, window_bounds = array<i64: 1, 128>}, {transform_indices = @transform_5, window_bounds = array<i64: 8, 128>}]} {
    %c0 = arith.constant 0 : index
    %c0_0 = arith.constant 0 : index
    %0 = vector.load %arg1[%c0, %c0_0] : memref<8x128xbf16, #tpu.memory_space<vmem>>, vector<8x128xbf16>
    %c0_1 = arith.constant 0 : index
    %c0_2 = arith.constant 0 : index
    %1 = vector.load %arg2[%c0_1, %c0_2] : memref<128x128xbf16, #tpu.memory_space<vmem>>, vector<128x128xbf16>
    %cst = arith.constant dense<0.000000e+00> : vector<8x128xf32>
    %2 = tpu.matmul %0, %1, %cst {dimension_numbers = #tpu.dot_dimension_numbers<[1], [0], [0], [1], [0, 0, 1, 1], [], []>} : vector<8x128xbf16>, vector<128x128xbf16>, vector<8x128xf32> -> vector<8x128xf32>
    %c0_3 = arith.constant 0 : index
    %c0_4 = arith.constant 0 : index
    %3 = vector.load %arg3[%c0_3, %c0_4] : memref<1x128xf32, #tpu.memory_space<vmem>>, vector<1x128xf32>
    %4 = vector.broadcast %3 : vector<1x128xf32> to vector<8x128xf32>
    %5 = arith.addf %2, %4 : vector<8x128xf32>
    %cst_5 = arith.constant 2.000000e-01 : f32
    %6 = vector.broadcast %cst_5 : f32 to vector<8x128xf32>
    %7 = arith.mulf %6, %5 : vector<8x128xf32>
    %8 = arith.maximumf %5, %7 : vector<8x128xf32>
    %9 = arith.truncf %8 : vector<8x128xf32> to vector<8x128xbf16>
    %c0_6 = arith.constant 0 : index
    %c0_7 = arith.constant 0 : index
    %10 = vector.load %arg4[%c0_6, %c0_7] : memref<128x128xbf16, #tpu.memory_space<vmem>>, vector<128x128xbf16>
    %cst_8 = arith.constant dense<0.000000e+00> : vector<8x128xf32>
    %11 = tpu.matmul %9, %10, %cst_8 {dimension_numbers = #tpu.dot_dimension_numbers<[1], [0], [0], [1], [0, 0, 1, 1], [], []>} : vector<8x128xbf16>, vector<128x128xbf16>, vector<8x128xf32> -> vector<8x128xf32>
    %c0_9 = arith.constant 0 : index
    %c0_10 = arith.constant 0 : index
    %12 = vector.load %arg5[%c0_9, %c0_10] : memref<1x128xf32, #tpu.memory_space<vmem>>, vector<1x128xf32>
    %13 = vector.broadcast %12 : vector<1x128xf32> to vector<8x128xf32>
    %14 = arith.addf %11, %13 : vector<8x128xf32>
    %cst_11 = arith.constant 0.000000e+00 : f32
    %15 = vector.broadcast %cst_11 : f32 to vector<8x128xf32>
    %16 = arith.maximumf %14, %15 : vector<8x128xf32>
    %c0_12 = arith.constant 0 : index
    %c0_13 = arith.constant 0 : index
    %17 = vector.load %arg6[%c0_12, %c0_13] : memref<8x128xf32, #tpu.memory_space<vmem>>, vector<8x128xf32>
    tpu.vector_store %arg6[%c0_12, %c0_13], %16 {strides = array<i32>} : memref<8x128xf32, #tpu.memory_space<vmem>>, vector<8x128xf32>,
    return
  }
  func.func @transform_0(%arg0: i32) -> (i32, i32) {
    %c0_i32 = arith.constant 0 : i32
    %c0_i32_0 = arith.constant 0 : i32
    return %arg0, %c0_i32 : i32, i32
  }
  func.func @transform_1(%arg0: i32) -> (i32, i32) {
    %c0_i32 = arith.constant 0 : i32
    %c0_i32_0 = arith.constant 0 : i32
    %c0_i32_1 = arith.constant 0 : i32
    return %c0_i32, %c0_i32_0 : i32, i32
  }
  func.func @transform_2(%arg0: i32) -> (i32, i32) {
    %c0_i32 = arith.constant 0 : i32
    %c0_i32_0 = arith.constant 0 : i32
    %c0_i32_1 = arith.constant 0 : i32
    return %c0_i32, %c0_i32_0 : i32, i32
  }
  func.func @transform_3(%arg0: i32) -> (i32, i32) {
    %c0_i32 = arith.constant 0 : i32
    %c0_i32_0 = arith.constant 0 : i32
    %c0_i32_1 = arith.constant 0 : i32
    return %c0_i32, %c0_i32_0 : i32, i32
  }
  func.func @transform_4(%arg0: i32) -> (i32, i32) {
    %c0_i32 = arith.constant 0 : i32
    %c0_i32_0 = arith.constant 0 : i32
    %c0_i32_1 = arith.constant 0 : i32
    return %c0_i32, %c0_i32_0 : i32, i32
  }
  func.func @transform_5(%arg0: i32) -> (i32, i32) {
    %c0_i32 = arith.constant 0 : i32
    %c0_i32_0 = arith.constant 0 : i32
    return %arg0, %c0_i32 : i32, i32
  }
}

</mosaic_0001>

<llo_original>
// kernel: mlp_g_forward.1
$region0: #{mlp_g_forward.1}
  #allocation0 [shape = 'u32[]', space=smem, size = 0x4, offset = 0x4, fixed_abs, tag = 'smem constant byte address 0x4 - core index']
  #allocation1 [shape = 'u32[144,128]{1,0:T(1,128)}', space=vmem, size = 0x12000, scoped, tag = 'internal scratch']
  %s0 = inlined_call_operand.vmem [shape: bf16[8,128], index: 0, kind: input, shape index: {}]
  %s1 = inlined_call_operand.hbm [shape: bf16[128,128], index: 1, kind: input, shape index: {}]
  %s2 = inlined_call_operand.vmem [shape: f32[1,128], index: 2, kind: input, shape index: {}]
  %s3 = inlined_call_operand.hbm [shape: bf16[128,128], index: 3, kind: input, shape index: {}]
  %s4 = inlined_call_operand.vmem [shape: f32[1,128], index: 4, kind: input, shape index: {}]
  %s5 = inlined_call_operand.hbm [shape: f32[8,128], index: 5, kind: output, shape index: {}]
  %s6 = sld [smem:[#allocation0]]
  $region38: #{mlp_g_forward.1} parent=0
    _
  %s8 = ssub.s32 1, %s6
  %s9 = scalar_select 0, %s8, %s6
  $region1: #{mlp_g_forward.1} parent=0
    #allocation2 [shape = 'u8[32768]{0}', space=vmem, size = 0x8000, scoped, tag = 'input window, operand 1, single buffered']
    #allocation3 [shape = 's32[1]{0}', space=sflag, size = 0x4, scoped, tag = 'scoped memory for mlp_g_forward.1']
    #allocation4 [shape = 's32[1]{0}', space=sflag, size = 0x4, scoped, tag = 'scoped memory for mlp_g_forward.1']
    #allocation5 [shape = 'u8[32768]{0}', space=vmem, size = 0x8000, scoped, tag = 'input window, operand 3, single buffered']
    #allocation6 [shape = 's32[1]{0}', space=sflag, size = 0x4, scoped, tag = 'scoped memory for mlp_g_forward.1']
    #allocation7 [shape = 'u8[4096]{0}', space=vmem, size = 0x1000, scoped, tag = 'output window, operand 0, single buffered']
    %10 = vsyncpa [#allocation3], 0
    %11 = vsyncpa [#allocation6], 0
    %12 = vsyncpa [#allocation4], 0
    // Predicated region
    $region2: #{mlp_g_forward.1} parent=1 // pred_check
      _
    $region3: #{mlp_g_forward.1} parent=1 // pred_check_branch
      %14 = sbr.rel (0) target = $region5
    $region4: #{mlp_g_forward.1} parent=1 // pred_region
      _
    $region5: #{mlp_g_forward.1} parent=1 // pred_fallthru
      _
    // Predicated region
    $region6: #{mlp_g_forward.1} parent=1 // pred_check
      _
    $region7: #{mlp_g_forward.1} parent=1 // pred_check_branch
      %16 = sbr.rel (0) target = $region9
    $region8: #{mlp_g_forward.1} parent=1 // pred_region
      %s18 = ssub.s32 1024, 1024
      %19 = vsyncadd [#allocation3], %s18
      %s20 = sshll.u32 [#allocation2], 4
      %s21 = int_to_ptr.vmem [resolvable:$true] %s20
      %26 = dma.hbm_to_vmem [thread:$0]  %s1, 1024, %s21, [#allocation3], 64, 64, 4
    $region9: #{mlp_g_forward.1} parent=1 // pred_fallthru
      _
    // Predicated region
    $region10: #{mlp_g_forward.1} parent=1 // pred_check
      _
    $region11: #{mlp_g_forward.1} parent=1 // pred_check_branch
      %28 = sbr.rel (0) target = $region13
    $region12: #{mlp_g_forward.1} parent=1 // pred_region
      _
    $region13: #{mlp_g_forward.1} parent=1 // pred_fallthru
      _
    // Predicated region
    $region14: #{mlp_g_forward.1} parent=1 // pred_check
      _
    $region15: #{mlp_g_forward.1} parent=1 // pred_check_branch
      %30 = sbr.rel (0) target = $region17
    $region16: #{mlp_g_forward.1} parent=1 // pred_region
      %s32 = ssub.s32 1024, 1024
      %33 = vsyncadd [#allocation6], %s32
      %s34 = sshll.u32 [#allocation5], 4
      %s35 = int_to_ptr.vmem [resolvable:$true] %s34
      %40 = dma.hbm_to_vmem [thread:$0]  %s3, 1024, %s35, [#allocation6], 64, 64, 4
    $region17: #{mlp_g_forward.1} parent=1 // pred_fallthru
      _
    // Predicated region
    $region18: #{mlp_g_forward.1} parent=1 // pred_check
      _
    $region19: #{mlp_g_forward.1} parent=1 // pred_check_branch
      %42 = sbr.rel (0) target = $region21
    $region20: #{mlp_g_forward.1} parent=1 // pred_region
      _
    $region21: #{mlp_g_forward.1} parent=1 // pred_fallthru
      _
    // Predicated region
    $region22: #{mlp_g_forward.1} parent=1 // pred_check
      _
    $region23: #{mlp_g_forward.1} parent=1 // pred_check_branch
      %44 = sbr.rel (0) target = $region25
    $region24: #{mlp_g_forward.1} parent=1 // pred_region
      %45 = dma.done [#allocation3], 1024
    $region25: #{mlp_g_forward.1} parent=1 // pred_fallthru
      _
    // Predicated region
    $region26: #{mlp_g_forward.1} parent=1 // pred_check
      _
    $region27: #{mlp_g_forward.1} parent=1 // pred_check_branch
      %47 = sbr.rel (0) target = $region29
    $region28: #{mlp_g_forward.1} parent=1 // pred_region
      %48 = dma.done [#allocation6], 1024
    $region29: #{mlp_g_forward.1} parent=1 // pred_fallthru
      _
    %v50 = vld [vmem:[%s0] sm:$0xf]
    %v51 = vld [vmem:[#allocation2] sm:$0xf]
    %v52 = vld [vmem:[#allocation2 + $0x4] sm:$0xf]
    %v53 = vld [vmem:[#allocation2 + $0x8] sm:$0xf]
    %v54 = vld [vmem:[#allocation2 + $0xc] sm:$0xf]
    %v55 = vld [vmem:[#allocation2 + $0x10] sm:$0xf]
    %v56 = vld [vmem:[#allocation2 + $0x14] sm:$0xf]
    %v57 = vld [vmem:[#allocation2 + $0x18] sm:$0xf]
    %v58 = vld [vmem:[#allocation2 + $0x1c] sm:$0xf]
    %v59 = vld [vmem:[#allocation2 + $0x20] sm:$0xf]
    %v60 = vld [vmem:[#allocation2 + $0x24] sm:$0xf]
    %v61 = vld [vmem:[#allocation2 + $0x28] sm:$0xf]
    %v62 = vld [vmem:[#allocation2 + $0x2c] sm:$0xf]
    %v63 = vld [vmem:[#allocation2 + $0x30] sm:$0xf]
    %v64 = vld [vmem:[#allocation2 + $0x34] sm:$0xf]
    %v65 = vld [vmem:[#allocation2 + $0x38] sm:$0xf]
    %v66 = vld [vmem:[#allocation2 + $0x3c] sm:$0xf]
    %v67 = vld [vmem:[%s2] sm:$0x1]
    %v69 = vlaneseq
    %v70 = vshrl.u32 %v69, 7
    %v71 = vsub.s32 0, %v70
    %v72 = vrot.slane %v67, %v71
    %v90 = vunpack.c.l.b16 %v51
    %v91 = vunpack.c.l.b16 %v52
    %v92 = vunpack.c.l.b16 %v53
    %v93 = vunpack.c.l.b16 %v54
    %v94 = vunpack.c.l.b16 %v55
    %v95 = vunpack.c.l.b16 %v56
    %v96 = vunpack.c.l.b16 %v57
    %v97 = vunpack.c.l.b16 %v58
    %v98 = vunpack.c.l.b16 %v59
    %v99 = vunpack.c.l.b16 %v60
    %v100 = vunpack.c.l.b16 %v61
    %v101 = vunpack.c.l.b16 %v62
    %v102 = vunpack.c.l.b16 %v63
    %v103 = vunpack.c.l.b16 %v64
    %v104 = vunpack.c.l.b16 %v65
    %v105 = vunpack.c.l.b16 %v66
    %v106 = vpack.c.b16 %v91, %v90
    %v107 = vpack.c.b16 %v93, %v92
    %v108 = vpack.c.b16 %v95, %v94
    %v109 = vpack.c.b16 %v97, %v96
    %v110 = vpack.c.b16 %v99, %v98
    %v111 = vpack.c.b16 %v101, %v100
    %v112 = vpack.c.b16 %v103, %v102
    %v113 = vpack.c.b16 %v105, %v104
    %122 = vmatprep.subr.bf16.mxu0 0
    %123 = vmatpush1.bf16.msra.mxu0 %v113
    %124 = vmatprep.subr.bf16.mxu0 0
    %125 = vmatpush1.bf16.msra.mxu0 %v112
    %126 = vmatprep.subr.bf16.mxu0 0
    %127 = vmatpush1.bf16.msra.mxu0 %v111
    %128 = vmatprep.subr.bf16.mxu0 0
    %129 = vmatpush1.bf16.msra.mxu0 %v110
    %130 = vmatprep.subr.bf16.mxu0 0
    %131 = vmatpush1.bf16.msra.mxu0 %v109
    %132 = vmatprep.subr.bf16.mxu0 0
    %133 = vmatpush1.bf16.msra.mxu0 %v108
    %134 = vmatprep.subr.bf16.mxu0 0
    %135 = vmatpush1.bf16.msra.mxu0 %v107
    %136 = vmatprep.subr.bf16.mxu0 0
    %137 = vmatpush1.bf16.msra.mxu0 %v106
    %138 = vmatprep.subr.bf16.mxu0 0
    %139 = vmatpush2.bf16.msra.mxu0 0
    %140 = vmatprep.subr.bf16.mxu0 0
    %141 = vmatpush2.bf16.msra.mxu0 0
    %142 = vmatprep.subr.bf16.mxu0 0
    %143 = vmatpush2.bf16.msra.mxu0 0
    %144 = vmatprep.subr.bf16.mxu0 0
    %145 = vmatpush2.bf16.msra.mxu0 0
    %146 = vmatprep.subr.bf16.mxu0 0
    %147 = vmatpush2.bf16.msra.mxu0 0
    %148 = vmatprep.subr.bf16.mxu0 0
    %149 = vmatpush2.bf16.msra.mxu0 0
    %150 = vmatprep.subr.bf16.mxu0 0
    %151 = vmatpush2.bf16.msra.mxu0 0
    %152 = vmatprep.subr.bf16.mxu0 0
    %153 = vmatpush2.bf16.msra.mxu0 0
    %154 = vmatprep.mubr.bf16.mxu0 0
    %155 = vmatmul.mubr.bf16.gmra.mxu0 %v50
    %v156 = vpop.f32.mrf.mxu0
    %v157 = vadd.f32 %v72, %v156
    %v158 = vpop.f32.mrf.mxu0
    %v159 = vpop.f32.mrf.mxu0
    %v160 = vpop.f32.mrf.mxu0
    %161 = vdwg.mxu0
    %v162 = vmul.f32 %v157, 0.2
    %v163 = vmax.f32 %v157, %v162
    %v164 = vpack.c.bf16 %v163, %v163
    %v165 = vld [vmem:[#allocation5] sm:$0xf]
    %v166 = vld [vmem:[#allocation5 + $0x4] sm:$0xf]
    %v167 = vld [vmem:[#allocation5 + $0x8] sm:$0xf]
    %v168 = vld [vmem:[#allocation5 + $0xc] sm:$0xf]
    %v169 = vld [vmem:[#allocation5 + $0x10] sm:$0xf]
    %v170 = vld [vmem:[#allocation5 + $0x14] sm:$0xf]
    %v171 = vld [vmem:[#allocation5 + $0x18] sm:$0xf]
    %v172 = vld [vmem:[#allocation5 + $0x1c] sm:$0xf]
    %v173 = vld [vmem:[#allocation5 + $0x20] sm:$0xf]
    %v174 = vld [vmem:[#allocation5 + $0x24] sm:$0xf]
    %v175 = vld [vmem:[#allocation5 + $0x28] sm:$0xf]
    %v176 = vld [vmem:[#allocation5 + $0x2c] sm:$0xf]
    %v177 = vld [vmem:[#allocation5 + $0x30] sm:$0xf]
    %v178 = vld [vmem:[#allocation5 + $0x34] sm:$0xf]
    %v179 = vld [vmem:[#allocation5 + $0x38] sm:$0xf]
    %v180 = vld [vmem:[#allocation5 + $0x3c] sm:$0xf]
    %v181 = vld [vmem:[%s4] sm:$0x1]
    %v183 = vlaneseq
    %v184 = vshrl.u32 %v183, 7
    %v185 = vsub.s32 0, %v184
    %v186 = vrot.slane %v181, %v185
    %v204 = vunpack.c.l.b16 %v165
    %v205 = vunpack.c.l.b16 %v166
    %v206 = vunpack.c.l.b16 %v167
    %v207 = vunpack.c.l.b16 %v168
    %v208 = vunpack.c.l.b16 %v169
    %v209 = vunpack.c.l.b16 %v170
    %v210 = vunpack.c.l.b16 %v171
    %v211 = vunpack.c.l.b16 %v172
    %v212 = vunpack.c.l.b16 %v173
    %v213 = vunpack.c.l.b16 %v174
    %v214 = vunpack.c.l.b16 %v175
    %v215 = vunpack.c.l.b16 %v176
    %v216 = vunpack.c.l.b16 %v177
    %v217 = vunpack.c.l.b16 %v178
    %v218 = vunpack.c.l.b16 %v179
    %v219 = vunpack.c.l.b16 %v180
    %v220 = vpack.c.b16 %v205, %v204
    %v221 = vpack.c.b16 %v207, %v206
    %v222 = vpack.c.b16 %v209, %v208
    %v223 = vpack.c.b16 %v211, %v210
    %v224 = vpack.c.b16 %v213, %v212
    %v225 = vpack.c.b16 %v215, %v214
    %v226 = vpack.c.b16 %v217, %v216
    %v227 = vpack.c.b16 %v219, %v218
    %236 = vmatprep.subr.bf16.mxu0 0
    %237 = vmatpush1.bf16.msra.mxu0 %v227
    %238 = vmatprep.subr.bf16.mxu0 0
    %239 = vmatpush1.bf16.msra.mxu0 %v226
    %240 = vmatprep.subr.bf16.mxu0 0
    %241 = vmatpush1.bf16.msra.mxu0 %v225
    %242 = vmatprep.subr.bf16.mxu0 0
    %243 = vmatpush1.bf16.msra.mxu0 %v224
    %244 = vmatprep.subr.bf16.mxu0 0
    %245 = vmatpush1.bf16.msra.mxu0 %v223
    %246 = vmatprep.subr.bf16.mxu0 0
    %247 = vmatpush1.bf16.msra.mxu0 %v222
    %248 = vmatprep.subr.bf16.mxu0 0
    %249 = vmatpush1.bf16.msra.mxu0 %v221
    %250 = vmatprep.subr.bf16.mxu0 0
    %251 = vmatpush1.bf16.msra.mxu0 %v220
    %252 = vmatprep.subr.bf16.mxu0 0
    %253 = vmatpush2.bf16.msra.mxu0 0
    %254 = vmatprep.subr.bf16.mxu0 0
    %255 = vmatpush2.bf16.msra.mxu0 0
    %256 = vmatprep.subr.bf16.mxu0 0
    %257 = vmatpush2.bf16.msra.mxu0 0
    %258 = vmatprep.subr.bf16.mxu0 0
    %259 = vmatpush2.bf16.msra.mxu0 0
    %260 = vmatprep.subr.bf16.mxu0 0
    %261 = vmatpush2.bf16.msra.mxu0 0
    %262 = vmatprep.subr.bf16.mxu0 0
    %263 = vmatpush2.bf16.msra.mxu0 0
    %264 = vmatprep.subr.bf16.mxu0 0
    %265 = vmatpush2.bf16.msra.mxu0 0
    %266 = vmatprep.subr.bf16.mxu0 0
    %267 = vmatpush2.bf16.msra.mxu0 0
    %268 = vmatprep.mubr.bf16.mxu0 0
    %269 = vmatmul.mubr.bf16.gmra.mxu0 %v164
    %v270 = vpop.f32.mrf.mxu0
    %v271 = vadd.f32 %v186, %v270
    %v272 = vpop.f32.mrf.mxu0
    %v273 = vpop.f32.mrf.mxu0
    %v274 = vpop.f32.mrf.mxu0
    %275 = vdwg.mxu0
    %v276 = vmax.f32 %v271, 0.0
    %277 = vst [vmem:[#allocation7] sm:$0xff] %v276
    // Predicated region
    $region30: #{mlp_g_forward.1} parent=1 // pred_check
      _
    $region31: #{mlp_g_forward.1} parent=1 // pred_check_branch
      %279 = sbr.rel (0) target = $region33
    $region32: #{mlp_g_forward.1} parent=1 // pred_region
      %s281 = ssub.s32 128, 128
      %282 = vsyncadd [#allocation4], %s281
      %s284 = sshll.u32 [#allocation7], 4
      %s285 = int_to_ptr.vmem [resolvable:$true] %s284
      %287 = dma.vmem_to_hbm [thread:$0]  %s285, 128, %s5, [#allocation4]
    $region33: #{mlp_g_forward.1} parent=1 // pred_fallthru
      _
    // Predicated region
    $region34: #{mlp_g_forward.1} parent=1 // pred_check
      _
    $region35: #{mlp_g_forward.1} parent=1 // pred_check_branch
      %289 = sbr.rel (0) target = $region37
    $region36: #{mlp_g_forward.1} parent=1 // pred_region
      %290 = dma.done [#allocation4], 128
    $region37: #{mlp_g_forward.1} parent=1 // pred_fallthru
      _
    %291 = vsyncpa [#allocation3], 1
    %292 = vsyncpa [#allocation6], 1
    %293 = vsyncpa [#allocation4], 1

</llo_original>
